<compile_context>
chip_gen: v6e
topology: v6e:2x2x1
jax: 0.10.0
libtpu: 0.0.40
codegen_flags: <defaults>
</compile_context>

<pallas_src>
import functools

import jax
import jax.numpy as jnp
from jax import lax
from jax.experimental import pallas as pl
from jax.experimental.pallas import tpu as pltpu


def _ekd_kernel(x_ref, t_ref, lab_ref, out_ref, *, index_new, temp_start,
                temp_stop, temperature, new_reduction):
    """One (batch, pixel-tile) block; channels on sublanes, pixels on lanes."""
    x = x_ref[...].astype(jnp.float32)       # (ch_new, TILE)   new-model logits
    tz = t_ref[...].astype(jnp.float32)      # (index_new, TILE) old-model logits
    lab = lab_ref[...]                       # (1, TILE) int32, 255 == unknown

    ch_new = x.shape[0]

    # --- per-pixel masks (lane vectors)
    mask_new = (lab >= index_new) & (lab < 255)                  # (1, TILE)
    mask_old = lab < index_new
    valid = (mask_new | mask_old).astype(jnp.float32)            # (1, TILE)

    # --- channel `index_new` of the (shared) inputs: gather-at-label or tail-sum
    if new_reduction == 'gt':
        lab_nu = jnp.where(lab == 255, 0, lab)                   # (1, TILE)
        ch_iota = lax.broadcasted_iota(jnp.int32, (ch_new, 1), 0)
        sel = ch_iota == lab_nu                                  # (ch_new, TILE)
        zg = jnp.sum(jnp.where(sel, x, 0.0), axis=0, keepdims=True)
    else:  # 'sum'
        zg = jnp.sum(x[index_new:, :], axis=0, keepdims=True)    # (1, TILE)

    # --- temperature-scaled "head" rows (channels 0 .. index_new-1).
    #     Channel index_new always has temperature 1 (zg stays untouched).
    zx = x[:index_new, :]                                        # (index_new, TILE)
    zt = tz
    if temp_stop > temp_start and temperature != 1.0:
        r = lax.broadcasted_iota(jnp.int32, (index_new, 1), 0)
        temp_rows = jnp.where((r >= temp_start) & (r < temp_stop),
                              jnp.float32(1.0 / temperature), jnp.float32(1.0))
        zx = temp_rows * zx
        zt = temp_rows * zt

    # --- stable logsumexp of the inputs over the C = index_new+1 channels
    m_in = jnp.maximum(jnp.max(zx, axis=0, keepdims=True), zg)   # (1, TILE)
    e_x = jnp.exp(zx - m_in)
    e_g = jnp.exp(zg - m_in)
    lse_in = m_in + jnp.log(jnp.sum(e_x, axis=0, keepdims=True) + e_g)

    # --- fused target selection: new_targets vs old_targets only differ in
    #     channels 0 and index_new; channels 1..index_new-1 are tz rows 1.. .
    row0 = lax.broadcasted_iota(jnp.int32, (index_new, 1), 0) == 0
    zt = jnp.where(row0 & mask_new, 0.0, zt)                     # channel 0
    if new_reduction == 'gt':
        zt_last = jnp.where(mask_new, tz[0:1, :], 0.0)           # channel index_new
    else:
        zt_last = jnp.zeros_like(zg)

    # --- single (unnormalized) softmax of the selected targets
    m_t = jnp.maximum(jnp.max(zt, axis=0, keepdims=True), zt_last)
    e_t = jnp.exp(zt - m_t)                                      # (index_new, TILE)
    e_l = jnp.exp(zt_last - m_t)                                 # (1, TILE)
    den_t = jnp.sum(e_t, axis=0, keepdims=True) + e_l
    num_z = jnp.sum(e_t * zx, axis=0, keepdims=True) + e_l * zg

    # cross-entropy per pixel:  H(q, p) = logsumexp(z) - E_q[z]
    loss_pix = valid * (lse_in - num_z / den_t)                  # (1, TILE)

    # --- per-block partial sum, written into a lane/sublane-aligned (8,128) slab
    tile_sum = jnp.sum(loss_pix)
    r8 = lax.broadcasted_iota(jnp.int32, (8, 128), 0)
    c128 = lax.broadcasted_iota(jnp.int32, (8, 128), 1)
    out_ref[...] = ((r8 == 0) & (c128 == 0)).astype(jnp.float32) * tile_sum


def _pick_tile(wh, max_tile_px):
    """Largest legal pixel tile: full extent, or a 128-multiple divisor of wh."""
    if wh <= max_tile_px:
        return wh
    t = (max_tile_px // 128) * 128
    while t >= 128:
        if wh % t == 0:
            return t
        t -= 128
    # TODO(synk): pad the pixel axis when wh has no 128-multiple divisor <= cap.
    return wh


def excluded_kd_loss(inputs, targets, labels, *, index_new, initial_nb_classes,
                     temperature_semiold=1.0, new_reduction='gt',
                     reduction='mean', max_tile_px=32768):
    """Pallas forward of ExcludedKnowledgeDistillationLoss.

    inputs:  (bs, ch_new, w, h) float  new-model logits (NCHW; f32 or bf16)
    targets: (bs, index_new, w, h) float old-model logits (NCHW)
    labels:  (bs, w, h) int labels, 255 == unknown
    """
    if new_reduction not in ('gt', 'sum'):
        raise ValueError(f'Unknown new_reduction={new_reduction}')
    if reduction not in ('mean', 'sum'):
        # TODO(synk): reduction='none' (per-pixel loss map) not wired through
        # the partial-sum kernel; only 'mean'/'sum' supported.
        raise ValueError(f'Unsupported reduction={reduction}')

    bs, ch_new, w, h = inputs.shape
    assert targets.shape == (bs, index_new, w, h)
    assert labels.shape == (bs, w, h)
    wh = w * h
    C = index_new + 1

    # Replicate torch slicing semantics temperature[:, initial_nb_classes:index_new]
    # on a C-channel axis (handles negative initial_nb_classes correctly).
    if index_new > initial_nb_classes:
        temp_start, temp_stop, _ = slice(initial_nb_classes, index_new).indices(C)
    else:
        temp_start, temp_stop = 0, 0

    # Free metadata reshapes only -- no transpose / pad / float-cast copies.
    x3 = inputs.reshape(bs, ch_new, wh)
    t3 = targets.reshape(bs, index_new, wh)
    lab3 = labels.reshape(bs, 1, wh)
    if lab3.dtype != jnp.int32:
        lab3 = lab3.astype(jnp.int32)

    tile = _pick_tile(wh, max_tile_px)
    grid = (bs, wh // tile)

    kernel = functools.partial(
        _ekd_kernel, index_new=index_new, temp_start=temp_start,
        temp_stop=temp_stop, temperature=float(temperature_semiold),
        new_reduction=new_reduction)

    partials = pl.pallas_call(
        kernel,
        out_shape=jax.ShapeDtypeStruct((grid[0], grid[1], 8, 128), jnp.float32),
        grid_spec=pltpu.PrefetchScalarGridSpec(
            num_scalar_prefetch=0,
            grid=grid,
            in_specs=[
                pl.BlockSpec((None, ch_new, tile), lambda b, i: (b, 0, i)),
                pl.BlockSpec((None, index_new, tile), lambda b, i: (b, 0, i)),
                pl.BlockSpec((None, 1, tile), lambda b, i: (b, 0, i)),
            ],
            out_specs=pl.BlockSpec((None, None, 8, 128),
                                   lambda b, i: (b, i, 0, 0)),
        ),
        compiler_params=pltpu.CompilerParams(
            dimension_semantics=("parallel", "parallel")),
    )(x3, t3, lab3)

    total = jnp.sum(partials)
    if reduction == 'mean':
        return total / jnp.float32(bs * wh)
    return total


def excluded_kd_loss_ref(inputs, targets, labels, *, index_new,
                         initial_nb_classes, temperature_semiold=1.0,
                         new_reduction='gt', reduction='mean'):
    """Pure-JAX transcription of the PyTorch forward, for validation."""
    bs, ch_new, w, h = inputs.shape
    C = index_new + 1
    labels_nu = jnp.where(labels == 255, 0, labels)
    temp = jnp.ones((bs, C, w, h), jnp.float32)
    if index_new > initial_nb_classes:
        temp = temp.at[:, initial_nb_classes:index_new].set(1.0 / temperature_semiold)

    new_inputs = jnp.zeros((bs, C, w, h), jnp.float32)
    new_targets = jnp.zeros((bs, C, w, h), jnp.float32)
    new_inputs = new_inputs.at[:, 0].set(inputs[:, 0])
    new_targets = new_targets.at[:, 1:index_new].set(targets[:, 1:])
    new_inputs = new_inputs.at[:, 1:index_new].set(inputs[:, 1:index_new])
    if new_reduction == 'gt':
        new_targets = new_targets.at[:, index_new].set(targets[:, 0])
        gathered = jnp.take_along_axis(
            jnp.transpose(inputs, (0, 2, 3, 1)), labels_nu[..., None],
            axis=-1)[..., 0]
        new_inputs = new_inputs.at[:, index_new].set(gathered)
    else:
        new_inputs = new_inputs.at[:, index_new].set(inputs[:, index_new:].sum(axis=1))
    loss_new = -(jax.nn.log_softmax(temp * new_inputs, axis=1)
                 * jax.nn.softmax(temp * new_targets, axis=1)).sum(axis=1)

    old_inputs = new_inputs  # identical construction in the reference module
    old_targets = jnp.zeros((bs, C, w, h), jnp.float32)
    old_targets = old_targets.at[:, 0].set(targets[:, 0])
    old_targets = old_targets.at[:, 1:index_new].set(targets[:, 1:index_new])
    loss_old = -(jax.nn.log_softmax(temp * old_inputs, axis=1)
                 * jax.nn.softmax(temp * old_targets, axis=1)).sum(axis=1)

    mask_new = ((labels >= index_new) & (labels < 255)).astype(jnp.float32)
    mask_old = (labels < index_new).astype(jnp.float32)
    loss = mask_new * loss_new + mask_old * loss_old
    if reduction == 'mean':
        return jnp.mean(loss)
    if reduction == 'sum':
        return jnp.sum(loss)
    return loss


if __name__ == "__main__":
    key = jax.random.PRNGKey(0)
    k1, k2, k3, k4 = jax.random.split(key, 4)

    # Module "hyper-parameters" (no learnable weights in this module).
    bs, ch_new, w, h = 2, 8, 16, 16
    index_new = 5
    initial_nb_classes = 3
    temperature_semiold = 2.0

    inputs = jax.random.normal(k1, (bs, ch_new, w, h), jnp.float32)
    targets = jax.random.normal(k2, (bs, index_new, w, h), jnp.float32)
    labels = jax.random.randint(k3, (bs, w, h), 0, ch_new)
    labels = jnp.where(jax.random.uniform(k4, (bs, w, h)) < 0.1, 255,
                       labels).astype(jnp.int32)

    for new_red, red in (('gt', 'mean'), ('sum', 'sum')):
        out = excluded_kd_loss(
            inputs, targets, labels,
            index_new=index_new, initial_nb_classes=initial_nb_classes,
            temperature_semiold=temperature_semiold,
            new_reduction=new_red, reduction=red)
        out = jax.block_until_ready(out)
        ref = excluded_kd_loss_ref(
            inputs, targets, labels,
            index_new=index_new, initial_nb_classes=initial_nb_classes,
            temperature_semiold=temperature_semiold,
            new_reduction=new_red, reduction=red)
        ref = jax.block_until_ready(ref)
        err_tol = 5e-3 * max(1.0, abs(float(ref)))
        assert abs(float(out) - float(ref)) < err_tol, \
            (new_red, red, float(out), float(ref))

    print("KERNEL_OK")
</pallas_src>

<mosaic_0001>
module attributes {stable_mosaic.version = 11 : i64} {
  func.func @_ekd_kernel(%arg0: i32, %arg1: i32, %arg2: memref<1x8x256xf32, #tpu.memory_space<vmem>>, %arg3: memref<1x5x256xf32, #tpu.memory_space<vmem>>, %arg4: memref<1x1x256xi32, #tpu.memory_space<vmem>>, %arg5: memref<1x1x8x128xf32, #tpu.memory_space<vmem>>) attributes {dimension_semantics = [#tpu.dimension_semantics<parallel>, #tpu.dimension_semantics<parallel>], iteration_bounds = array<i64: 2, 1>, scalar_prefetch = 0 : i64, scratch_operands = 0 : i64, tpu.core_type = #tpu.core_type<tc>, window_params = [{transform_indices = @transform_0, window_bounds = array<i64: 1, 8, 256>}, {transform_indices = @transform_1, window_bounds = array<i64: 1, 5, 256>}, {transform_indices = @transform_2, window_bounds = array<i64: 1, 1, 256>}, {transform_indices = @transform_3, window_bounds = array<i64: 1, 1, 8, 128>}]} {
    %c0 = arith.constant 0 : index
    %c0_0 = arith.constant 0 : index
    %c0_1 = arith.constant 0 : index
    %0 = vector.load %arg2[%c0, %c0_0, %c0_1] : memref<1x8x256xf32, #tpu.memory_space<vmem>>, vector<1x8x256xf32>
    %1 = vector.shape_cast %0 : vector<1x8x256xf32> to vector<8x256xf32>
    %c0_2 = arith.constant 0 : index
    %c0_3 = arith.constant 0 : index
    %c0_4 = arith.constant 0 : index
    %2 = vector.load %arg3[%c0_2, %c0_3, %c0_4] : memref<1x5x256xf32, #tpu.memory_space<vmem>>, vector<1x5x256xf32>
    %3 = vector.shape_cast %2 : vector<1x5x256xf32> to vector<5x256xf32>
    %c0_5 = arith.constant 0 : index
    %c0_6 = arith.constant 0 : index
    %c0_7 = arith.constant 0 : index
    %4 = vector.load %arg4[%c0_5, %c0_6, %c0_7] : memref<1x1x256xi32, #tpu.memory_space<vmem>>, vector<1x1x256xi32>
    %5 = vector.shape_cast %4 : vector<1x1x256xi32> to vector<1x256xi32>
    %c5_i32 = arith.constant 5 : i32
    %6 = vector.broadcast %c5_i32 : i32 to vector<1x256xi32>
    %7 = arith.cmpi sge, %5, %6 : vector<1x256xi32>
    %c255_i32 = arith.constant 255 : i32
    %8 = vector.broadcast %c255_i32 : i32 to vector<1x256xi32>
    %9 = arith.cmpi slt, %5, %8 : vector<1x256xi32>
    %10 = arith.andi %7, %9 : vector<1x256xi1>
    %c5_i32_8 = arith.constant 5 : i32
    %11 = vector.broadcast %c5_i32_8 : i32 to vector<1x256xi32>
    %12 = arith.cmpi slt, %5, %11 : vector<1x256xi32>
    %13 = arith.ori %10, %12 : vector<1x256xi1>
    %14 = arith.extui %13 : vector<1x256xi1> to vector<1x256xi32>
    %15 = arith.sitofp %14 : vector<1x256xi32> to vector<1x256xf32>
    %c255_i32_9 = arith.constant 255 : i32
    %16 = vector.broadcast %c255_i32_9 : i32 to vector<1x256xi32>
    %17 = arith.cmpi eq, %5, %16 : vector<1x256xi32>
    %c0_i32 = arith.constant 0 : i32
    %18 = vector.broadcast %c0_i32 : i32 to vector<1x256xi32>
    %19 = arith.select %17, %18, %5 : vector<1x256xi1>, vector<1x256xi32>
    %20 = tpu.iota {dimensions = array<i32: 0>} : vector<8x1xi32>
    %21 = vector.broadcast %20 : vector<8x1xi32> to vector<8x256xi32>
    %22 = vector.broadcast %19 : vector<1x256xi32> to vector<8x256xi32>
    %23 = arith.cmpi eq, %21, %22 : vector<8x256xi32>
    %cst = arith.constant 0.000000e+00 : f32
    %24 = vector.broadcast %cst : f32 to vector<8x256xf32>
    %25 = arith.select %23, %1, %24 : vector<8x256xi1>, vector<8x256xf32>
    %cst_10 = arith.constant dense<0.000000e+00> : vector<256xf32>
    %26 = vector.multi_reduction <add>, %25, %cst_10 [0] : vector<8x256xf32> to vector<256xf32>
    %27 = vector.shape_cast %26 : vector<256xf32> to vector<1x256xf32>
    %28 = vector.extract_strided_slice %1 {offsets = [0, 0], sizes = [5, 256], strides = [1, 1]} : vector<8x256xf32> to vector<5x256xf32>
    %29 = tpu.iota {dimensions = array<i32: 0>} : vector<5x1xi32>
    %c3_i32 = arith.constant 3 : i32
    %30 = vector.broadcast %c3_i32 : i32 to vector<5x1xi32>
    %31 = arith.cmpi sge, %29, %30 : vector<5x1xi32>
    %c5_i32_11 = arith.constant 5 : i32
    %32 = vector.broadcast %c5_i32_11 : i32 to vector<5x1xi32>
    %33 = arith.cmpi slt, %29, %32 : vector<5x1xi32>
    %34 = arith.andi %31, %33 : vector<5x1xi1>
    %cst_12 = arith.constant 5.000000e-01 : f32
    %cst_13 = arith.constant 1.000000e+00 : f32
    %35 = vector.broadcast %cst_12 : f32 to vector<5x1xf32>
    %36 = vector.broadcast %cst_13 : f32 to vector<5x1xf32>
    %37 = arith.select %34, %35, %36 : vector<5x1xi1>, vector<5x1xf32>
    %38 = vector.broadcast %37 : vector<5x1xf32> to vector<5x256xf32>
    %39 = arith.mulf %38, %28 : vector<5x256xf32>
    %40 = vector.broadcast %37 : vector<5x1xf32> to vector<5x256xf32>
    %41 = arith.mulf %40, %3 : vector<5x256xf32>
    %cst_14 = arith.constant dense<0xFF800000> : vector<256xf32>
    %42 = vector.multi_reduction <maximumf>, %39, %cst_14 [0] : vector<5x256xf32> to vector<256xf32>
    %43 = vector.shape_cast %42 : vector<256xf32> to vector<1x256xf32>
    %44 = arith.maximumf %43, %27 : vector<1x256xf32>
    %45 = vector.broadcast %44 : vector<1x256xf32> to vector<5x256xf32>
    %46 = arith.subf %39, %45 : vector<5x256xf32>
    %47 = math.exp %46 : vector<5x256xf32>
    %48 = arith.subf %27, %44 : vector<1x256xf32>
    %49 = math.exp %48 : vector<1x256xf32>
    %cst_15 = arith.constant dense<0.000000e+00> : vector<256xf32>
    %50 = vector.multi_reduction <add>, %47, %cst_15 [0] : vector<5x256xf32> to vector<256xf32>
    %51 = vector.shape_cast %50 : vector<256xf32> to vector<1x256xf32>
    %52 = arith.addf %51, %49 : vector<1x256xf32>
    %53 = math.log %52 : vector<1x256xf32>
    %54 = arith.addf %44, %53 : vector<1x256xf32>
    %55 = tpu.iota {dimensions = array<i32: 0>} : vector<5x1xi32>
    %c0_i32_16 = arith.constant 0 : i32
    %56 = vector.broadcast %c0_i32_16 : i32 to vector<5x1xi32>
    %57 = arith.cmpi eq, %55, %56 : vector<5x1xi32>
    %58 = vector.broadcast %57 : vector<5x1xi1> to vector<5x256xi1>
    %59 = vector.broadcast %10 : vector<1x256xi1> to vector<5x256xi1>
    %60 = arith.andi %58, %59 : vector<5x256xi1>
    %cst_17 = arith.constant 0.000000e+00 : f32
    %61 = vector.broadcast %cst_17 : f32 to vector<5x256xf32>
    %62 = arith.select %60, %61, %41 : vector<5x256xi1>, vector<5x256xf32>
    %63 = vector.extract_strided_slice %3 {offsets = [0, 0], sizes = [1, 256], strides = [1, 1]} : vector<5x256xf32> to vector<1x256xf32>
    %cst_18 = arith.constant 0.000000e+00 : f32
    %64 = vector.broadcast %cst_18 : f32 to vector<1x256xf32>
    %65 = arith.select %10, %63, %64 : vector<1x256xi1>, vector<1x256xf32>
    %cst_19 = arith.constant dense<0xFF800000> : vector<256xf32>
    %66 = vector.multi_reduction <maximumf>, %62, %cst_19 [0] : vector<5x256xf32> to vector<256xf32>
    %67 = vector.shape_cast %66 : vector<256xf32> to vector<1x256xf32>
    %68 = arith.maximumf %67, %65 : vector<1x256xf32>
    %69 = vector.broadcast %68 : vector<1x256xf32> to vector<5x256xf32>
    %70 = arith.subf %62, %69 : vector<5x256xf32>
    %71 = math.exp %70 : vector<5x256xf32>
    %72 = arith.subf %65, %68 : vector<1x256xf32>
    %73 = math.exp %72 : vector<1x256xf32>
    %cst_20 = arith.constant dense<0.000000e+00> : vector<256xf32>
    %74 = vector.multi_reduction <add>, %71, %cst_20 [0] : vector<5x256xf32> to vector<256xf32>
    %75 = vector.shape_cast %74 : vector<256xf32> to vector<1x256xf32>
    %76 = arith.addf %75, %73 : vector<1x256xf32>
    %77 = arith.mulf %71, %39 : vector<5x256xf32>
    %cst_21 = arith.constant dense<0.000000e+00> : vector<256xf32>
    %78 = vector.multi_reduction <add>, %77, %cst_21 [0] : vector<5x256xf32> to vector<256xf32>
    %79 = vector.shape_cast %78 : vector<256xf32> to vector<1x256xf32>
    %80 = arith.mulf %73, %27 : vector<1x256xf32>
    %81 = arith.addf %79, %80 : vector<1x256xf32>
    %82 = arith.divf %81, %76 : vector<1x256xf32>
    %83 = arith.subf %54, %82 : vector<1x256xf32>
    %84 = arith.mulf %15, %83 : vector<1x256xf32>
    %85 = vector.shape_cast %84 : vector<1x256xf32> to vector<1x1x256xf32>
    %cst_22 = arith.constant dense<0.000000e+00> : vector<1xf32>
    %86 = vector.multi_reduction <add>, %85, %cst_22 [1, 2] : vector<1x1x256xf32> to vector<1xf32>
    %87 = vector.shape_cast %86 : vector<1xf32> to vector<1x1x1xf32>
    %88 = vector.extract %87[0, 0, 0] : f32 from vector<1x1x1xf32>
    %89 = tpu.iota {dimensions = array<i32: 0>} : vector<8x128xi32>
    %90 = tpu.iota {dimensions = array<i32: 1>} : vector<8x128xi32>
    %c0_i32_23 = arith.constant 0 : i32
    %91 = vector.broadcast %c0_i32_23 : i32 to vector<8x128xi32>
    %92 = arith.cmpi eq, %89, %91 : vector<8x128xi32>
    %c0_i32_24 = arith.constant 0 : i32
    %93 = vector.broadcast %c0_i32_24 : i32 to vector<8x128xi32>
    %94 = arith.cmpi eq, %90, %93 : vector<8x128xi32>
    %95 = arith.andi %92, %94 : vector<8x128xi1>
    %96 = arith.extui %95 : vector<8x128xi1> to vector<8x128xi32>
    %97 = arith.sitofp %96 : vector<8x128xi32> to vector<8x128xf32>
    %98 = vector.broadcast %88 : f32 to vector<8x128xf32>
    %99 = arith.mulf %97, %98 : vector<8x128xf32>
    %c0_25 = arith.constant 0 : index
    %c0_26 = arith.constant 0 : index
    %c0_27 = arith.constant 0 : index
    %c0_28 = arith.constant 0 : index
    %100 = vector.load %arg5[%c0_25, %c0_26, %c0_27, %c0_28] : memref<1x1x8x128xf32, #tpu.memory_space<vmem>>, vector<1x1x8x128xf32>
    %101 = vector.shape_cast %100 : vector<1x1x8x128xf32> to vector<8x128xf32>
    %102 = vector.shape_cast %99 : vector<8x128xf32> to vector<1x1x8x128xf32>
    tpu.vector_store %arg5[%c0_25, %c0_26, %c0_27, %c0_28], %102 {strides = array<i32>} : memref<1x1x8x128xf32, #tpu.memory_space<vmem>>, vector<1x1x8x128xf32>,
    return
  }
  func.func @transform_0(%arg0: i32, %arg1: i32) -> (i32, i32, i32) {
    %c0_i32 = arith.constant 0 : i32
    %c0_i32_0 = arith.constant 0 : i32
    return %arg0, %c0_i32, %arg1 : i32, i32, i32
  }
  func.func @transform_1(%arg0: i32, %arg1: i32) -> (i32, i32, i32) {
    %c0_i32 = arith.constant 0 : i32
    %c0_i32_0 = arith.constant 0 : i32
    return %arg0, %c0_i32, %arg1 : i32, i32, i32
  }
  func.func @transform_2(%arg0: i32, %arg1: i32) -> (i32, i32, i32) {
    %c0_i32 = arith.constant 0 : i32
    %c0_i32_0 = arith.constant 0 : i32
    return %arg0, %c0_i32, %arg1 : i32, i32, i32
  }
  func.func @transform_3(%arg0: i32, %arg1: i32) -> (i32, i32, i32, i32) {
    %c0_i32 = arith.constant 0 : i32
    %c0_i32_0 = arith.constant 0 : i32
    %c0_i32_1 = arith.constant 0 : i32
    return %arg0, %arg1, %c0_i32, %c0_i32_0 : i32, i32, i32, i32
  }
}

</mosaic_0001>

<llo_original>
// kernel: tpu_custom_call.1
$region0: #{tpu_custom_call.1}
  #allocation0 [shape = 'u32[]', space=smem, size = 0x4, offset = 0x4, fixed_abs, tag = 'smem constant byte address 0x4 - core index']
  #allocation1 [shape = 'u32[144,128]{1,0:T(1,128)}', space=vmem, size = 0x12000, scoped, tag = 'internal scratch']
  %s0 = inlined_call_operand.vmem [shape: f32[2,8,256], index: 0, kind: input, shape index: {}]
  %s1 = inlined_call_operand.vmem [shape: f32[2,5,256], index: 1, kind: input, shape index: {}]
  %s2 = inlined_call_operand.vmem [shape: s32[2,1,256], index: 2, kind: input, shape index: {}]
  %s3 = inlined_call_operand.hbm [shape: f32[2,1,8,128], index: 3, kind: output, shape index: {}]
  %s4 = sld [smem:[#allocation0]]
  $region45: #{tpu_custom_call.1} parent=0
    _
  %s6 = ssub.s32 1, %s4
  %s7 = scalar_select 0, %s6, %s4
  $region1: #{tpu_custom_call.1} parent=0
    #allocation2 [shape = 'u8[8192]{0}', space=vmem, size = 0x2000, scoped, tag = 'output window, operand 0']
    #allocation3 [shape = 's32[2]{0}', space=sflag, size = 0x8, scoped, tag = 'scoped memory for tpu_custom_call.1']
    %8 = vsyncpa [#allocation3], 0
    %s9 = scalar_lea.sflag [#allocation3], 1
    %10 = vsyncpa %s9, 0
    loop: start=0, step=1, limit=4
    $region2: #{tpu_custom_call.1} parent=1 // loop_pre_header
      _
    $region3: #{tpu_custom_call.1} parent=1 // loop_header
      %s12 = sphi 0, %s16
      %p13 = scmp.ge.s32.totalorder %s12, 4
      %s19 = sphi 0, %s31
      %s20 = sphi 0, %s27
      %s21 = sphi 0, %s19
      %s22 = sphi 0, %s20
      %s23 = sphi 0, %s21
      %s24 = sphi 0, %s22
      %s36 = sphi 0, %s38
      %s39 = sphi 0, %s36
      %s40 = sphi 0, %s39
      %s56 = sphi 0, %s40
      %s64 = sphi 0, %s66
      %s67 = sphi 0, %s64
      %s68 = sphi 0, %s67
      %s84 = sphi 0, %s68
      %s92 = sphi 0, %s94
      %s95 = sphi 0, %s92
      %s96 = sphi 0, %s95
      %s112 = sphi 0, %s96
      %s120 = sphi 0, %s122
      %s123 = sphi 0, %s120
      %s124 = sphi 0, %s123
      %s140 = sphi 0, %s124
    $region4: #{tpu_custom_call.1} parent=1 // loop_header_branch
      %15 = sbr.rel (%p13) target = $region8
    $region5: #{tpu_custom_call.1} parent=1 // loop_body
      %s17 = ssub.s32 %s12, 1
      %s18 = ssub.s32 %s12, 2
      %s25 = sadd.s32 1, %s20
      %p26 = scmp.ge.s32.totalorder %s25, 1
      %s27 = scalar_select %p26, 0, %s25
      %s28 = sadd.s32 1, %s19
      %s29 = scalar_select %p26, %s28, %s19
      %p30 = scmp.ge.s32.totalorder %s29, 2
      %s31 = scalar_select %p30, 0, %s29
      %s32 = ssub.s32 %s19, %s31
      %s33 = ssub.s32 %s20, %s27
      %s34 = sor.u32 %s32, %s33
      %p35 = scmp.eq.s32.totalorder %s34, 0
      %s37 = sadd.s32 %s36, 1
      %s38 = scalar_select %p35, %s36, %s37
      %p41 = pneg %p35
      %p42 = scmp.eq.s32.totalorder %s12, 1
      %p43 = por %p41, %p42
      %p44 = scmp.ne.s32.totalorder %s36, %s39
      %p45 = scmp.eq.s32.totalorder %s12, 0
      %p46 = por %p44, %p45
      %p47 = scmp.ne.s32.totalorder %s36, %s39
      %p48 = scmp.eq.s32.totalorder %s17, 1
      %p49 = por %p47, %p48
      %p50 = scmp.ne.s32.totalorder %s39, %s40
      %p51 = scmp.eq.s32.totalorder %s17, 0
      %p52 = por %p50, %p51
      %p53 = scmp.ne.s32.totalorder %s39, %s40
      %p54 = scmp.eq.s32.totalorder %s18, 1
      %p55 = por %p53, %p54
      %p57 = scmp.ne.s32.totalorder %s40, %s56
      %p58 = scmp.eq.s32.totalorder %s18, 0
      %p59 = por %p57, %p58
      %s60 = ssub.s32 %s19, %s31
      %s61 = ssub.s32 %s20, %s27
      %s62 = sor.u32 %s60, %s61
      %p63 = scmp.eq.s32.totalorder %s62, 0
      %s65 = sadd.s32 %s64, 1
      %s66 = scalar_select %p63, %s64, %s65
      %p69 = pneg %p63
      %p70 = scmp.eq.s32.totalorder %s12, 1
      %p71 = por %p69, %p70
      %p72 = scmp.ne.s32.totalorder %s64, %s67
      %p73 = scmp.eq.s32.totalorder %s12, 0
      %p74 = por %p72, %p73
      %p75 = scmp.ne.s32.totalorder %s64, %s67
      %p76 = scmp.eq.s32.totalorder %s17, 1
      %p77 = por %p75, %p76
      %p78 = scmp.ne.s32.totalorder %s67, %s68
      %p79 = scmp.eq.s32.totalorder %s17, 0
      %p80 = por %p78, %p79
      %p81 = scmp.ne.s32.totalorder %s67, %s68
      %p82 = scmp.eq.s32.totalorder %s18, 1
      %p83 = por %p81, %p82
      %p85 = scmp.ne.s32.totalorder %s68, %s84
      %p86 = scmp.eq.s32.totalorder %s18, 0
      %p87 = por %p85, %p86
      %s88 = ssub.s32 %s19, %s31
      %s89 = ssub.s32 %s20, %s27
      %s90 = sor.u32 %s88, %s89
      %p91 = scmp.eq.s32.totalorder %s90, 0
      %s93 = sadd.s32 %s92, 1
      %s94 = scalar_select %p91, %s92, %s93
      %p97 = pneg %p91
      %p98 = scmp.eq.s32.totalorder %s12, 1
      %p99 = por %p97, %p98
      %p100 = scmp.ne.s32.totalorder %s92, %s95
      %p101 = scmp.eq.s32.totalorder %s12, 0
      %p102 = por %p100, %p101
      %p103 = scmp.ne.s32.totalorder %s92, %s95
      %p104 = scmp.eq.s32.totalorder %s17, 1
      %p105 = por %p103, %p104
      %p106 = scmp.ne.s32.totalorder %s95, %s96
      %p107 = scmp.eq.s32.totalorder %s17, 0
      %p108 = por %p106, %p107
      %p109 = scmp.ne.s32.totalorder %s95, %s96
      %p110 = scmp.eq.s32.totalorder %s18, 1
      %p111 = por %p109, %p110
      %p113 = scmp.ne.s32.totalorder %s96, %s112
      %p114 = scmp.eq.s32.totalorder %s18, 0
      %p115 = por %p113, %p114
      %s116 = ssub.s32 %s19, %s31
      %s117 = ssub.s32 %s20, %s27
      %s118 = sor.u32 %s116, %s117
      %p119 = scmp.eq.s32.totalorder %s118, 0
      %s121 = sadd.s32 %s120, 1
      %s122 = scalar_select %p119, %s120, %s121
      %p125 = pneg %p119
      %p126 = scmp.eq.s32.totalorder %s12, 1
      %p127 = por %p125, %p126
      %p128 = scmp.ne.s32.totalorder %s120, %s123
      %p129 = scmp.eq.s32.totalorder %s12, 0
      %p130 = por %p128, %p129
      %p131 = scmp.ne.s32.totalorder %s120, %s123
      %p132 = scmp.eq.s32.totalorder %s17, 1
      %p133 = por %p131, %p132
      %p134 = scmp.ne.s32.totalorder %s123, %s124
      %p135 = scmp.eq.s32.totalorder %s17, 0
      %p136 = por %p134, %p135
      %p137 = scmp.ne.s32.totalorder %s123, %s124
      %p138 = scmp.eq.s32.totalorder %s18, 1
      %p139 = por %p137, %p138
      %p141 = scmp.ne.s32.totalorder %s124, %s140
      %p142 = scmp.eq.s32.totalorder %s18, 0
      %p143 = por %p141, %p142
      %p144 = scmp.le.s32.totalorder 1, %s12
      %p145 = scmp.lt.s32.totalorder %s12, 3
      %p146 = pnand %p144, %p145
      %p147 = pneg %p146
      // Predicated region
      $region9: #{tpu_custom_call.1} parent=5 // pred_check
        _
      $region10: #{tpu_custom_call.1} parent=5 // pred_check_branch
        %149 = sbr.rel (%p146) target = $region12
      $region11: #{tpu_custom_call.1} parent=5 // pred_region
        %s150 = ssub.s32 %s12, 1
      $region12: #{tpu_custom_call.1} parent=5 // pred_fallthru
        _
      %p151 = scmp.lt.s32.totalorder %s12, 2
      // Predicated region
      $region13: #{tpu_custom_call.1} parent=5 // pred_check
        %p152 = pneg %p151
      $region14: #{tpu_custom_call.1} parent=5 // pred_check_branch
        %154 = sbr.rel (%p152) target = $region16
      $region15: #{tpu_custom_call.1} parent=5 // pred_region
        // Predicated region
        $region17: #{tpu_custom_call.1} parent=15 // pred_check
          %p155 = pneg %p46
        $region18: #{tpu_custom_call.1} parent=15 // pred_check_branch
          %157 = sbr.rel (%p155) target = $region20
        $region19: #{tpu_custom_call.1} parent=15 // pred_region
          %s158 = smul.u32 2, %s20
          %p159 = scmp.lt.s32.totalorder %s19, 1
          %s160 = scalar_select %p159, %s19, 1
          %p161 = scmp.lt.s32.totalorder %s158, 1
          %s162 = scalar_select %p161, %s158, 1
          %s163 = smul.addr %s160, 2
          %s164 = sadd.s32 %s162, %s163
          %s165 = smul.addr %s164, 8
          %s166 = scalar_lea.vmem %s0, %s165
          %s167 = smul.u32 2, %s20
        $region20: #{tpu_custom_call.1} parent=15 // pred_fallthru
          _
        // Predicated region
        $region21: #{tpu_custom_call.1} parent=15 // pred_check
          %p168 = pneg %p74
        $region22: #{tpu_custom_call.1} parent=15 // pred_check_branch
          %170 = sbr.rel (%p168) target = $region24
        $region23: #{tpu_custom_call.1} parent=15 // pred_region
          %s171 = smul.u32 2, %s20
          %p172 = scmp.lt.s32.totalorder %s19, 1
          %s173 = scalar_select %p172, %s19, 1
          %p174 = scmp.lt.s32.totalorder %s171, 1
          %s175 = scalar_select %p174, %s171, 1
          %s176 = smul.addr %s173, 2
          %s177 = sadd.s32 %s175, %s176
          %s178 = smul.addr %s177, 8
          %s179 = scalar_lea.vmem %s1, %s178
          %s180 = smul.u32 2, %s20
        $region24: #{tpu_custom_call.1} parent=15 // pred_fallthru
          _
        // Predicated region
        $region25: #{tpu_custom_call.1} parent=15 // pred_check
          %p181 = pneg %p102
        $region26: #{tpu_custom_call.1} parent=15 // pred_check_branch
          %183 = sbr.rel (%p181) target = $region28
        $region27: #{tpu_custom_call.1} parent=15 // pred_region
          %s184 = smul.u32 2, %s20
          %p185 = scmp.lt.s32.totalorder %s19, 1
          %s186 = scalar_select %p185, %s19, 1
          %p187 = scmp.lt.s32.totalorder %s184, 1
          %s188 = scalar_select %p187, %s184, 1
          %s189 = smul.addr %s186, 2
          %s190 = sadd.s32 %s188, %s189
          %s191 = scalar_lea.vmem %s2, %s190
          %s192 = smul.u32 2, %s20
        $region28: #{tpu_custom_call.1} parent=15 // pred_fallthru
          _
      $region16: #{tpu_custom_call.1} parent=5 // pred_fallthru
        _
      %p193 = scmp.le.s32.totalorder 1, %s12
      %p194 = scmp.lt.s32.totalorder %s12, 3
      %p195 = pnand %p193, %p194
      %p196 = pneg %p195
      // Predicated region
      $region29: #{tpu_custom_call.1} parent=5 // pred_check
        _
      $region30: #{tpu_custom_call.1} parent=5 // pred_check_branch
        %198 = sbr.rel (%p195) target = $region32
      $region31: #{tpu_custom_call.1} parent=5 // pred_region
        %s199 = ssub.s32 %s12, 1
        %s200 = smul.u32 2, %s22
        %p201 = scmp.lt.s32.totalorder %s21, 1
        %s202 = scalar_select %p201, %s21, 1
        %p203 = scmp.lt.s32.totalorder %s200, 1
        %s204 = scalar_select %p203, %s200, 1
        %s205 = smul.addr %s202, 2
        %s206 = sadd.s32 %s204, %s205
        %s207 = smul.addr %s206, 8
        %s208 = scalar_lea.vmem %s0, %s207
        %p209 = pneg %p52
        %p210 = pneg %p49
        %s211 = smul.u32 2, %s22
        %p212 = scmp.lt.s32.totalorder %s21, 1
        %s213 = scalar_select %p212, %s21, 1
        %p214 = scmp.lt.s32.totalorder %s211, 1
        %s215 = scalar_select %p214, %s211, 1
        %s216 = smul.addr %s213, 2
        %s217 = sadd.s32 %s215, %s216
        %s218 = smul.addr %s217, 8
        %s219 = scalar_lea.vmem %s1, %s218
        %p220 = pneg %p80
        %p221 = pneg %p77
        %s222 = smul.u32 2, %s22
        %p223 = scmp.lt.s32.totalorder %s21, 1
        %s224 = scalar_select %p223, %s21, 1
        %p225 = scmp.lt.s32.totalorder %s222, 1
        %s226 = scalar_select %p225, %s222, 1
        %s227 = smul.addr %s224, 2
        %s228 = sadd.s32 %s226, %s227
        %s229 = scalar_lea.vmem %s2, %s228
        %p230 = pneg %p108
        %p231 = pneg %p105
        %p232 = pneg %p136
        %p233 = pneg %p133
        %s234 = sand.u32 %s123, 1
        %s235 = scalar_lea.sflag [#allocation3], %s234
        %s236 = sand.u32 %s123, 1
        %s237 = smul.addr %s236, 8
        %s238 = scalar_lea.vmem [#allocation2], %s237
        %s239 = smul.u32 2, %s22
        %p240 = scmp.lt.s32.totalorder %s21, 1
        %s241 = scalar_select %p240, %s21, 1
        %p242 = scmp.lt.s32.totalorder %s239, 1
        %s243 = scalar_select %p242, %s239, 1
        %s244 = smul.addr %s241, 2
        %s245 = sadd.s32 %s243, %s244
        %s246 = smul.addr %s245, 8
        %s247 = scalar_lea.vmem %s0, %s246
        %s248 = smul.u32 2, %s22
        %s249 = smul.u32 2, %s22
        %p250 = scmp.lt.s32.totalorder %s21, 1
        %s251 = scalar_select %p250, %s21, 1
        %p252 = scmp.lt.s32.totalorder %s249, 1
        %s253 = scalar_select %p252, %s249, 1
        %s254 = smul.addr %s251, 2
        %s255 = sadd.s32 %s253, %s254
        %s256 = smul.addr %s255, 8
        %s257 = scalar_lea.vmem %s1, %s256
        %s258 = smul.u32 2, %s22
        %s259 = smul.u32 2, %s22
        %p260 = scmp.lt.s32.totalorder %s21, 1
        %s261 = scalar_select %p260, %s21, 1
        %p262 = scmp.lt.s32.totalorder %s259, 1
        %s263 = scalar_select %p262, %s259, 1
        %s264 = smul.addr %s261, 2
        %s265 = sadd.s32 %s263, %s264
        %s266 = scalar_lea.vmem %s2, %s265
        %s267 = smul.u32 2, %s22
        %v268 = vld [vmem:[%s247] sm:$0xff]
        %v269 = vld [vmem:[%s247 + $0x8] sm:$0xff]
        %v270 = vld [vmem:[%s257] sm:$0x1f]
        %v271 = vld [vmem:[%s257 + $0x8] sm:$0x1f]
        %v272 = vld [vmem:[%s266] sm:$0x3]
        %vm273 = vcmp.ge.s32.totalorder %v272, 5
        %vm274 = vcmp.lt.s32.totalorder %v272, 255
        %vm275 = vmand %vm273, %vm274
        %vm276 = vcmp.lt.s32.totalorder %v272, 5
        %vm277 = vmor %vm275, %vm276
        %v278 = vsel %vm277, 1, 0
        %v279 = vcvt.s32.f32 %v278
        %vm280 = vcmp.eq.s32.totalorder %v272, 255
        %v281 = vsel %vm280, 0, %v272
        %v282 = vlaneseq
        %v283 = vshrl.u32 %v282, 7
        %v284 = vlaneseq
        %v285 = vshrl.u32 %v284, 7
        %v286 = vsub.s32 0, %v285
        %v287 = vrot.slane %v281, %v286
        %v288 = vlaneseq
        %v289 = vshrl.u32 %v288, 7
        %v290 = vsub.s32 1, %v289
        %v291 = vrot.slane %v281, %v290
        %vm292 = vcmp.eq.s32.totalorder %v283, %v287
        %vm293 = vcmp.eq.s32.totalorder %v283, %v291
        %v294 = vsel %vm292, %v268, 0.0
        %v295 = vsel %vm293, %v269, 0.0
        %v296 = vrot.slane %v294, 4
        %v297 = vadd.f32 %v294, %v296
        %v298 = vrot.slane %v297, 2
        %v299 = vadd.f32 %v297, %v298
        %v300 = vrot.slane %v299, 1
        %v301 = vadd.f32 %v299, %v300
        %v302 = vrot.slane %v295, 4
        %v303 = vadd.f32 %v295, %v302
        %v304 = vrot.slane %v303, 2
        %v305 = vadd.f32 %v303, %v304
        %v306 = vrot.slane %v305, 1
        %v307 = vadd.f32 %v305, %v306
        %vm308 = vcmp.ge.s32.totalorder %v283, 3
        %vm309 = vcmp.lt.s32.totalorder %v283, 5
        %vm310 = vmand %vm308, %vm309
        %v311 = vsel %vm310, 0.5, 1.0
        %v312 = vmul.f32 %v311, %v268
        %v313 = vmul.f32 %v311, %v269
        %v314 = vmul.f32 %v311, %v270
        %v315 = vmul.f32 %v311, %v271
        %vm316 = vcmask 1044480
        %v317 = vsel %vm316, %v312, -inf
        %v318 = vrot.slane %v317, 4
        %v319 = vmax.f32 %v317, %v318
        %v320 = vrot.slane %v319, 2
        %v321 = vmax.f32 %v319, %v320
        %v322 = vrot.slane %v321, 1
        %v323 = vmax.f32 %v321, %v322
        %v324 = vsel %vm316, %v313, -inf
        %v325 = vrot.slane %v324, 4
        %v326 = vmax.f32 %v324, %v325
        %v327 = vrot.slane %v326, 2
        %v328 = vmax.f32 %v326, %v327
        %v329 = vrot.slane %v328, 1
        %v330 = vmax.f32 %v328, %v329
        %v331 = vmax.f32 %v323, %v301
        %v332 = vmax.f32 %v330, %v307
        %v333 = vsub.f32 %v312, %v331
        %v334 = vsub.f32 %v313, %v332
        %v335 = vmul.f32 %v333, 1.442695
        %v336 = vpow.pop %v335
        %v337 = vmul.f32 %v334, 1.442695
        %v338 = vpow.pop %v337
        %v339 = vsub.f32 %v301, %v331
        %v340 = vsub.f32 %v307, %v332
        %v341 = vmul.f32 %v339, 1.442695
        %v342 = vpow.pop %v341
        %v343 = vmul.f32 %v340, 1.442695
        %v344 = vpow.pop %v343
        %v345 = vsel %vm316, %v336, 0.0
        %v346 = vrot.slane %v345, 4
        %v347 = vadd.f32 %v345, %v346
        %v348 = vrot.slane %v347, 2
        %v349 = vadd.f32 %v347, %v348
        %v350 = vrot.slane %v349, 1
        %v351 = vadd.f32 %v349, %v350
        %v352 = vsel %vm316, %v338, 0.0
        %v353 = vrot.slane %v352, 4
        %v354 = vadd.f32 %v352, %v353
        %v355 = vrot.slane %v354, 2
        %v356 = vadd.f32 %v354, %v355
        %v357 = vrot.slane %v356, 1
        %v358 = vadd.f32 %v356, %v357
        %v359 = vadd.f32 %v351, %v342
        %v360 = vadd.f32 %v358, %v344
        %v361 = vlog2.pop %v359
        %v362 = vmul.f32 %v361, 0.6931472
        %v363 = vlog2.pop %v360
        %v364 = vmul.f32 %v363, 0.6931472
        %v365 = vadd.f32 %v331, %v362
        %v366 = vadd.f32 %v332, %v364
        %vm367 = vcmp.eq.s32.totalorder %v283, 0
        %v368 = vsel %vm367, 1, 0
        %vm369 = vcmp.eq.s32.totalorder %v368, 1
        %v370 = vsel %vm275, 1, 0
        %v371 = vlaneseq
        %v372 = vshrl.u32 %v371, 7
        %v373 = vsub.s32 0, %v372
        %v374 = vrot.slane %v370, %v373
        %v375 = vlaneseq
        %v376 = vshrl.u32 %v375, 7
        %v377 = vsub.s32 1, %v376
        %v378 = vrot.slane %v370, %v377
        %vm379 = vcmp.eq.s32.totalorder %v374, 1
        %vm380 = vcmp.eq.s32.totalorder %v378, 1
        %vm381 = vmand %vm369, %vm379
        %vm382 = vmand %vm369, %vm380
        %v383 = vsel %vm381, 0.0, %v314
        %v384 = vsel %vm382, 0.0, %v315
        %v387 = vcombine.low %v270, %v271
        %v389 = vunpack.c.l.s4 1966171168
        %v390 = vunpack.c.0.s8 %v389
        %v391 = vlaneseq
        %v392 = vshrl.u32 %v391, 7
        %v393 = vsub.s32 %v390, %v392
        %v394 = vrot.slane %v387, %v393
        %v396 = vunpack.c.l.s4 1966171168
        %v397 = vunpack.c.0.s8 %v396
        %v398 = vlaneseq
        %v399 = vshrl.u32 %v398, 7
        %v400 = vsub.s32 %v397, %v399
        %v401 = vrot.slane %v394, %v400
        %v403 = vsel %vm275, %v401, 0.0
        %v404 = vsel %vm316, %v383, -inf
        %v405 = vrot.slane %v404, 4
        %v406 = vmax.f32 %v404, %v405
        %v407 = vrot.slane %v406, 2
        %v408 = vmax.f32 %v406, %v407
        %v409 = vrot.slane %v408, 1
        %v410 = vmax.f32 %v408, %v409
        %v411 = vsel %vm316, %v384, -inf
        %v412 = vrot.slane %v411, 4
        %v413 = vmax.f32 %v411, %v412
        %v414 = vrot.slane %v413, 2
        %v415 = vmax.f32 %v413, %v414
        %v416 = vrot.slane %v415, 1
        %v417 = vmax.f32 %v415, %v416
        %v419 = vlaneseq
        %v420 = vshrl.u32 %v419, 7
        %v421 = vsub.s32 0, %v420
        %v422 = vrot.slane %v403, %v421
        %v423 = vlaneseq
        %v424 = vshrl.u32 %v423, 7
        %v425 = vsub.s32 1, %v424
        %v426 = vrot.slane %v403, %v425
        %v429 = vmax.f32 %v410, %v422
        %v430 = vmax.f32 %v417, %v426
        %v431 = vlaneseq
        %v432 = vshrl.u32 %v431, 7
        %v433 = vsub.s32 0, %v432
        %v434 = vrot.slane %v429, %v433
        %v435 = vlaneseq
        %v436 = vshrl.u32 %v435, 7
        %v437 = vsub.s32 0, %v436
        %v438 = vrot.slane %v430, %v437
        %v439 = vsub.f32 %v383, %v434
        %v440 = vsub.f32 %v384, %v438
        %v441 = vmul.f32 %v439, 1.442695
        %v442 = vpow.pop %v441
        %v443 = vmul.f32 %v440, 1.442695
        %v444 = vpow.pop %v443
        %v447 = vcombine.low %v429, %v430
        %v449 = vunpack.c.l.s4 1966171168
        %v450 = vunpack.c.0.s8 %v449
        %v451 = vlaneseq
        %v452 = vshrl.u32 %v451, 7
        %v453 = vsub.s32 %v450, %v452
        %v454 = vrot.slane %v447, %v453
        %v456 = vunpack.c.l.s4 1966171168
        %v457 = vunpack.c.0.s8 %v456
        %v458 = vlaneseq
        %v459 = vshrl.u32 %v458, 7
        %v460 = vsub.s32 %v457, %v459
        %v461 = vrot.slane %v454, %v460
        %v463 = vsub.f32 %v403, %v461
        %v464 = vmul.f32 %v463, 1.442695
        %v465 = vpow.pop %v464
        %v466 = vsel %vm316, %v442, 0.0
        %v467 = vrot.slane %v466, 4
        %v468 = vadd.f32 %v466, %v467
        %v469 = vrot.slane %v468, 2
        %v470 = vadd.f32 %v468, %v469
        %v471 = vrot.slane %v470, 1
        %v472 = vadd.f32 %v470, %v471
        %v473 = vsel %vm316, %v444, 0.0
        %v474 = vrot.slane %v473, 4
        %v475 = vadd.f32 %v473, %v474
        %v476 = vrot.slane %v475, 2
        %v477 = vadd.f32 %v475, %v476
        %v478 = vrot.slane %v477, 1
        %v479 = vadd.f32 %v477, %v478
        %v481 = vlaneseq
        %v482 = vshrl.u32 %v481, 7
        %v483 = vsub.s32 0, %v482
        %v484 = vrot.slane %v465, %v483
        %v485 = vlaneseq
        %v486 = vshrl.u32 %v485, 7
        %v487 = vsub.s32 1, %v486
        %v488 = vrot.slane %v465, %v487
        %v491 = vadd.f32 %v472, %v484
        %v492 = vadd.f32 %v479, %v488
        %v493 = vmul.f32 %v442, %v312
        %v494 = vmul.f32 %v444, %v313
        %v495 = vsel %vm316, %v493, 0.0
        %v496 = vrot.slane %v495, 4
        %v497 = vadd.f32 %v495, %v496
        %v498 = vrot.slane %v497, 2
        %v499 = vadd.f32 %v497, %v498
        %v500 = vrot.slane %v499, 1
        %v501 = vadd.f32 %v499, %v500
        %v502 = vsel %vm316, %v494, 0.0
        %v503 = vrot.slane %v502, 4
        %v504 = vadd.f32 %v502, %v503
        %v505 = vrot.slane %v504, 2
        %v506 = vadd.f32 %v504, %v505
        %v507 = vrot.slane %v506, 1
        %v508 = vadd.f32 %v506, %v507
        %v511 = vcombine.low %v301, %v307
        %v513 = vunpack.c.l.s4 1966171168
        %v514 = vunpack.c.0.s8 %v513
        %v515 = vlaneseq
        %v516 = vshrl.u32 %v515, 7
        %v517 = vsub.s32 %v514, %v516
        %v518 = vrot.slane %v511, %v517
        %v520 = vunpack.c.l.s4 1966171168
        %v521 = vunpack.c.0.s8 %v520
        %v522 = vlaneseq
        %v523 = vshrl.u32 %v522, 7
        %v524 = vsub.s32 %v521, %v523
        %v525 = vrot.slane %v518, %v524
        %v527 = vmul.f32 %v465, %v525
        %v529 = vlaneseq
        %v530 = vshrl.u32 %v529, 7
        %v531 = vsub.s32 0, %v530
        %v532 = vrot.slane %v527, %v531
        %v533 = vlaneseq
        %v534 = vshrl.u32 %v533, 7
        %v535 = vsub.s32 1, %v534
        %v536 = vrot.slane %v527, %v535
        %v539 = vadd.f32 %v501, %v532
        %v540 = vadd.f32 %v508, %v536
        %v541 = vrcp.pop %v491
        %v542 = vmul.f32 %v539, %v541
        %v543 = vrcp.pop %v492
        %v544 = vmul.f32 %v540, %v543
        %v545 = vsub.f32 %v365, %v542
        %v546 = vsub.f32 %v366, %v544
        %v549 = vcombine.low %v545, %v546
        %v551 = vunpack.c.l.s4 1966171168
        %v552 = vunpack.c.0.s8 %v551
        %v553 = vlaneseq
        %v554 = vshrl.u32 %v553, 7
        %v555 = vsub.s32 %v552, %v554
        %v556 = vrot.slane %v549, %v555
        %v558 = vunpack.c.l.s4 1966171168
        %v559 = vunpack.c.0.s8 %v558
        %v560 = vlaneseq
        %v561 = vshrl.u32 %v560, 7
        %v562 = vsub.s32 %v559, %v561
        %v563 = vrot.slane %v556, %v562
        %v565 = vmul.f32 %v279, %v563
        %v567 = vlaneseq
        %v568 = vshrl.u32 %v567, 7
        %v569 = vsub.s32 0, %v568
        %v570 = vrot.slane %v565, %v569
        %v571 = vlaneseq
        %v572 = vshrl.u32 %v571, 7
        %v573 = vsub.s32 1, %v572
        %v574 = vrot.slane %v565, %v573
        %vm577 = vcmask 1040384
        %v578 = vsel %vm577, %v570, 0.0
        %v579 = vsel %vm577, %v574, 0.0
        %v580 = vadd.f32 %v578, %v579
        %581 = vadd.xlane.f32.xlu0 %v580
        %v582 = vpop.xlane.xlu0 %581
        %v583 = vrot.slane %v582, 4
        %v584 = vadd.f32 %v582, %v583
        %v585 = vrot.slane %v584, 2
        %v586 = vadd.f32 %v584, %v585
        %v587 = vrot.slane %v586, 1
        %v588 = vadd.f32 %v586, %v587
        %s589 = vtos %v588
        %v590 = vlaneseq
        %v591 = vand.u32 %v590, 127
        %vm592 = vcmp.eq.s32.totalorder %v591, 0
        %vm593 = vmand %vm367, %vm592
        %v594 = vsel %vm593, 1, 0
        %v595 = vcvt.s32.f32 %v594
        %v596 = vstv %s589
        %v597 = vmul.f32 %v595, %v596
        %598 = vst [vmem:[%s238] sm:$0xff] %v597
        %s599 = sand.u32 %s123, 1
        %s600 = scalar_lea.sflag [#allocation3], %s599
        %s601 = sand.u32 %s123, 1
        %s602 = smul.addr %s601, 8
        %s603 = scalar_lea.vmem [#allocation2], %s602
        // Predicated region
        $region33: #{tpu_custom_call.1} parent=31 // pred_check
          %p604 = pneg %p133
        $region34: #{tpu_custom_call.1} parent=31 // pred_check_branch
          %606 = sbr.rel (%p604) target = $region36
        $region35: #{tpu_custom_call.1} parent=31 // pred_region
          %s608 = ssub.s32 128, 128
          %609 = vsyncadd %s600, %s608
          %s610 = sadd.s32 %s22, %s21
          %s611 = smul.addr %s610, 128
          %s612 = scalar_lea.hbm %s3, %s611
          %s614 = sshll.u32 %s603, 4
          %s615 = int_to_ptr.vmem [resolvable:$true] %s614
          %617 = dma.vmem_to_hbm [thread:$0]  %s615, 128, %s612, %s600
        $region36: #{tpu_custom_call.1} parent=31 // pred_fallthru
          _
      $region32: #{tpu_custom_call.1} parent=5 // pred_fallthru
        _
      %p618 = scmp.le.s32.totalorder 2, %s12
      // Predicated region
      $region37: #{tpu_custom_call.1} parent=5 // pred_check
        %p619 = pneg %p618
      $region38: #{tpu_custom_call.1} parent=5 // pred_check_branch
        %621 = sbr.rel (%p619) target = $region40
      $region39: #{tpu_custom_call.1} parent=5 // pred_region
        %s622 = ssub.s32 %s12, 2
        // Predicated region
        $region41: #{tpu_custom_call.1} parent=39 // pred_check
          %p623 = pneg %p139
        $region42: #{tpu_custom_call.1} parent=39 // pred_check_branch
          %625 = sbr.rel (%p623) target = $region44
        $region43: #{tpu_custom_call.1} parent=39 // pred_region
          %s626 = sand.u32 %s124, 1
          %s627 = scalar_lea.sflag [#allocation3], %s626
          %s628 = sand.u32 %s124, 1
          %s629 = smul.addr %s628, 8
          %s630 = scalar_lea.vmem [#allocation2], %s629
          %631 = dma.done %s627, 128
        $region44: #{tpu_custom_call.1} parent=39 // pred_fallthru
          _
      $region40: #{tpu_custom_call.1} parent=5 // pred_fallthru
        _
    $region6: #{tpu_custom_call.1} parent=1 // loop_footer
      %s16 = sadd.s32 1, %s12
    $region7: #{tpu_custom_call.1} parent=1 // loop_footer_branch
      %11 = sbr.rel target = $region3
    $region8: #{tpu_custom_call.1} parent=1 // loop_exit
      _
    %632 = vsyncpa [#allocation3], 1
    %s633 = scalar_lea.sflag [#allocation3], 1
    %634 = vsyncpa %s633, 1

</llo_original>
